<compile_context>
chip_gen: v7x
topology: tpu7x:2x2x1
jax: 0.10.0
libtpu: 0.0.40
codegen_flags: <defaults>
</compile_context>

<pallas_src>
import functools

import jax
import jax.numpy as jnp
import numpy as np
from jax.experimental import pallas as pl
from jax.experimental.pallas import tpu as pltpu


# ----------------------------- helpers / sizing ---------------------------- #

def conv_out_size(h, k, stride, padding, dilation):
    return (h + 2 * padding - dilation * (k - 1) - 1) // stride + 1


def _round_up(x, m):
    return ((x + m - 1) // m) * m


# -------------------- Pallas kernel 1: scales 3x3 conv --------------------- #

def _scales_conv3x3_kernel(w_ref, xp_ref, o_ref, *, C, H, W):
    # w_ref : SMEM (C*9 + 1,) f32   [w(c, ky, kx) row-major, then bias]
    # xp_ref: VMEM (1, C, H+2, W+2) f32 (spatially pre-padded input)
    # o_ref : VMEM (1, 1, H, W)     f32
    xv = xp_ref[0]                                            # (C, H+2, W+2)
    acc = jnp.full((H, W), w_ref[C * 9], dtype=jnp.float32)   # start from bias
    for c in range(C):
        for ky in range(3):
            for kx in range(3):
                acc = acc + w_ref[c * 9 + ky * 3 + kx] * xv[c, ky:ky + H, kx:kx + W]
    o_ref[0, 0] = jnp.maximum(acc, 0.0)                       # ReLU (scales_net)


def scales_conv_relu(x, w_sc, b_sc):
    """ReLU(Conv2d(C_in -> 1, 3x3, pad=1)(x)). x: (B,C,H,W) f32 -> (B,1,H,W) f32."""
    B, C, H, W = x.shape
    xp = jnp.pad(x, ((0, 0), (0, 0), (1, 1), (1, 1)))
    w_flat = jnp.concatenate([w_sc.reshape(-1), b_sc.reshape(-1)]).astype(jnp.float32)
    kernel = functools.partial(_scales_conv3x3_kernel, C=C, H=H, W=W)
    return pl.pallas_call(
        kernel,
        out_shape=jax.ShapeDtypeStruct((B, 1, H, W), jnp.float32),
        grid=(B,),
        in_specs=[
            pl.BlockSpec(memory_space=pltpu.MemorySpace.SMEM),            # weights+bias
            pl.BlockSpec((1, C, H + 2, W + 2), lambda b: (b, 0, 0, 0)),   # padded x
        ],
        out_specs=pl.BlockSpec((1, 1, H, W), lambda b: (b, 0, 0, 0)),
        compiler_params=pltpu.CompilerParams(dimension_semantics=("parallel",)),
    )(w_flat, xp)


# ---------------- Pallas kernel 2: lane-dense conv matmul ------------------ #

def _conv_matmul_kernel(p_ref, w_ref, b_ref, o_ref):
    # p_ref: (1, Kd, TM) bf16, w_ref: (C_out, Kd) bf16, b_ref: (C_out, 1) f32
    # o_ref: (1, C_out, TM) f32  -- TM (>=128) on lanes => unmasked stores
    acc = jnp.dot(w_ref[...], p_ref[0], preferred_element_type=jnp.float32)
    o_ref[0] = (acc + b_ref[...]).astype(o_ref.dtype)


def pallas_conv_matmul(patches, weight, bias, *, tm_target=512):
    """patches: (B, Kd, M) bf16, weight: (C_out, Kd) bf16, bias: (C_out,) f32
    -> (B, C_out, M) f32 computed as out[b] = weight @ patches[b] + bias[:, None]."""
    B, Kd, M = patches.shape
    C_out, Kd2 = weight.shape
    assert Kd == Kd2
    tm = min(tm_target, _round_up(M, 128))
    m_pad = _round_up(M, tm)
    if m_pad != M:
        patches = jnp.pad(patches, ((0, 0), (0, 0), (0, m_pad - M)))
    bias2d = bias.reshape(C_out, 1).astype(jnp.float32)

    # VMEM budget: double-buffered patch/out tiles + resident weight/bias.
    # Clamp to [16 MiB, 48 MiB] so the limit is valid on v5e/v6e (128 MiB
    # physical) and on v7x (64 MiB physical) alike.
    blk = 2 * (Kd * tm * 2) + 2 * (C_out * tm * 4) + C_out * Kd * 2 + C_out * 4
    vmem_limit = int(min(48 * 2 ** 20, max(16 * 2 ** 20, 4 * blk)))

    out = pl.pallas_call(
        _conv_matmul_kernel,
        out_shape=jax.ShapeDtypeStruct((B, C_out, m_pad), jnp.float32),
        grid=(B, m_pad // tm),
        in_specs=[
            pl.BlockSpec((1, Kd, tm), lambda b, m: (b, 0, m)),    # patch tile
            pl.BlockSpec((C_out, Kd), lambda b, m: (0, 0)),       # resident weight
            pl.BlockSpec((C_out, 1), lambda b, m: (0, 0)),        # bias column
        ],
        out_specs=pl.BlockSpec((1, C_out, tm), lambda b, m: (b, 0, m)),
        compiler_params=pltpu.CompilerParams(
            dimension_semantics=("parallel", "parallel"),
            vmem_limit_bytes=vmem_limit),
    )(patches, weight, bias2d)
    if m_pad != M:
        out = out[:, :, :M]
    return out


# ------------------------------ JAX glue ----------------------------------- #

def ada_patches(x, scales, k, stride, padding, dilation, out_dtype=jnp.bfloat16):
    """Scale-adaptive im2col, feature-major output (B, C*k*k, HO*WO).
    Per-output-pixel scale multiplies the kernel offsets; bilinear interpolation,
    zeros outside. The corner gather is XLA advanced indexing (no clean small
    Pallas equivalent); layout is chosen so no post-transpose of the expanded
    tensor is needed."""
    B, C, H, W = x.shape
    HO = conv_out_size(H, k, stride, padding, dilation)
    WO = conv_out_size(W, k, stride, padding, dilation)
    assert scales.shape == (B, 1, HO, WO), "scales map must match conv output size"

    ctr = (k - 1) / 2.0
    center_y = jnp.arange(HO, dtype=jnp.float32) * stride - padding + dilation * ctr
    center_x = jnp.arange(WO, dtype=jnp.float32) * stride - padding + dilation * ctr
    off = dilation * (jnp.arange(k, dtype=jnp.float32) - ctr)                  # (k,)

    def sample_one(xb, sb):
        # xb: (C, H, W), sb: (HO, WO); coords built in (ky, kx, HO, WO) layout.
        sy = (center_y[None, None, :, None]
              + sb[None, None, :, :] * off[:, None, None, None])   # (k,1,HO,WO)
        sx = (center_x[None, None, None, :]
              + sb[None, None, :, :] * off[None, :, None, None])   # (1,k,HO,WO)
        sy = jnp.broadcast_to(sy, (k, k, HO, WO))
        sx = jnp.broadcast_to(sx, (k, k, HO, WO))

        y0 = jnp.floor(sy)
        x0 = jnp.floor(sx)
        wy1 = sy - y0
        wx1 = sx - x0
        wy0 = 1.0 - wy1
        wx0 = 1.0 - wx1
        y0i = y0.astype(jnp.int32)
        x0i = x0.astype(jnp.int32)

        def gather(yy, xx):
            valid = ((yy >= 0) & (yy < H) & (xx >= 0) & (xx < W)).astype(xb.dtype)
            yc = jnp.clip(yy, 0, H - 1)
            xc = jnp.clip(xx, 0, W - 1)
            return xb[:, yc, xc] * valid[None]                     # (C,k,k,HO,WO)

        out = (wy0 * wx0)[None] * gather(y0i, x0i) \
            + (wy0 * wx1)[None] * gather(y0i, x0i + 1) \
            + (wy1 * wx0)[None] * gather(y0i + 1, x0i) \
            + (wy1 * wx1)[None] * gather(y0i + 1, x0i + 1)         # (C,k,k,HO,WO)
        return out.reshape(C * k * k, HO * WO)                     # free reshape

    p = jax.vmap(sample_one)(x, scales[:, 0])                      # (B, C*k*k, HO*WO)
    return p.astype(out_dtype), HO, WO


# ------------------------------- adaModule --------------------------------- #

def init_params(key, in_channels, out_channels, kernel_size):
    k1, k2, k3 = jax.random.split(key, 3)
    # adaConv2d params (Conv2d default-style uniform bound, deterministic)
    fan_in = in_channels * kernel_size * kernel_size
    bound = 1.0 / np.sqrt(fan_in)
    w_conv = jax.random.uniform(k1, (out_channels, in_channels, kernel_size, kernel_size),
                                jnp.float32, -bound, bound)
    b_conv = jax.random.uniform(k2, (out_channels,), jnp.float32, -bound, bound)
    # scales_conv: weights_init_uniform_rule -> n = 1*3*3, U(-1/3, 1/3), bias = 1
    y = 1.0 / np.sqrt(1 * 3 * 3)
    w_sc = jax.random.uniform(k3, (1, in_channels, 3, 3), jnp.float32, -y, y)
    b_sc = jnp.ones((1,), jnp.float32)
    return dict(w_conv=w_conv, b_conv=b_conv, w_sc=w_sc, b_sc=b_sc)


def ada_module_forward(params, x, *, kernel_size, stride=1, padding=0, dilation=1):
    B, C, H, W = x.shape
    C_out = params["w_conv"].shape[0]
    K = kernel_size

    # scales = ReLU(Conv2d(C_in -> 1, 3x3, pad=1)(x))  -- Pallas VPU kernel
    scales = scales_conv_relu(x, params["w_sc"], params["b_sc"])        # (B,1,H,W)

    # adaConv2d(x, scales): adaptive bilinear sampling (glue) + Pallas matmul
    p_ada, HO, WO = ada_patches(x, scales, K, stride, padding, dilation)
    w_flat = params["w_conv"].reshape(C_out, -1).astype(jnp.bfloat16)   # (C_out, C*K*K)
    out = pallas_conv_matmul(p_ada, w_flat, params["b_conv"])           # (B,C_out,HO*WO)
    return out.reshape(B, C_out, HO, WO)                                # NCHW, free reshape


# ---------------------------------- main ------------------------------------ #

if __name__ == "__main__":
    B, C_in, C_out, H, W, K = 2, 4, 8, 16, 16, 3
    stride, padding, dilation = 1, 1, 1

    key = jax.random.PRNGKey(0)
    kx, kp = jax.random.split(key)
    x = jax.random.normal(kx, (B, C_in, H, W), jnp.float32)
    params = init_params(kp, C_in, C_out, K)

    out = ada_module_forward(params, x, kernel_size=K,
                             stride=stride, padding=padding, dilation=dilation)
    out = jax.block_until_ready(out)
    assert out.shape == (B, C_out, H, W), out.shape

    # --- reference check 1: scales conv (Pallas VPU vs XLA conv) ---
    scales_pallas = scales_conv_relu(x, params["w_sc"], params["b_sc"])
    scales_ref = jax.lax.conv_general_dilated(
        x, params["w_sc"], window_strides=(1, 1), padding=((1, 1), (1, 1)),
        dimension_numbers=("NCHW", "OIHW", "NCHW"),
        precision=jax.lax.Precision.HIGHEST)
    scales_ref = jnp.maximum(scales_ref + params["b_sc"].reshape(1, 1, 1, 1), 0.0)
    np.testing.assert_allclose(np.asarray(scales_pallas), np.asarray(scales_ref),
                               rtol=1e-4, atol=1e-4)

    # --- reference check 2: main conv matmul on identical bf16 patches/weights ---
    p_ada, HO, WO = ada_patches(x, scales_pallas, K, stride, padding, dilation)
    w_flat = params["w_conv"].reshape(C_out, -1).astype(jnp.bfloat16)
    ref = jnp.einsum("ok,bkm->bom",
                     w_flat.astype(jnp.float32), p_ada.astype(jnp.float32),
                     precision=jax.lax.Precision.HIGHEST)
    ref = ref + params["b_conv"][None, :, None]
    ref = ref.reshape(B, C_out, HO, WO)
    np.testing.assert_allclose(np.asarray(out), np.asarray(ref), rtol=1e-3, atol=1e-3)

    print("KERNEL_OK")
</pallas_src>

<mosaic_0001>
module attributes {stable_mosaic.version = 11 : i64} {
  func.func @_scales_conv3x3_kernel(%arg0: i32, %arg1: memref<37xf32, #tpu.memory_space<smem>>, %arg2: memref<1x4x18x18xf32, #tpu.memory_space<vmem>>, %arg3: memref<1x1x16x16xf32, #tpu.memory_space<vmem>>) attributes {dimension_semantics = [#tpu.dimension_semantics<parallel>], iteration_bounds = array<i64: 2>, scalar_prefetch = 0 : i64, scratch_operands = 0 : i64, tpu.core_type = #tpu.core_type<tc>, window_params = [{transform_indices = @transform_0, window_bounds = array<i64: 37>}, {transform_indices = @transform_1, window_bounds = array<i64: 1, 4, 18, 18>}, {transform_indices = @transform_2, window_bounds = array<i64: 1, 1, 16, 16>}]} {
    %c0 = arith.constant 0 : index
    %c0_0 = arith.constant 0 : index
    %c0_1 = arith.constant 0 : index
    %c0_2 = arith.constant 0 : index
    %0 = vector.load %arg2[%c0, %c0_0, %c0_1, %c0_2] : memref<1x4x18x18xf32, #tpu.memory_space<vmem>>, vector<1x4x18x18xf32>
    %1 = vector.shape_cast %0 : vector<1x4x18x18xf32> to vector<4x18x18xf32>
    %c36 = arith.constant 36 : index
    %2 = memref.load %arg1[%c36] : memref<37xf32, #tpu.memory_space<smem>>
    %3 = vector.broadcast %2 : f32 to vector<16x16xf32>
    %c0_3 = arith.constant 0 : index
    %4 = memref.load %arg1[%c0_3] : memref<37xf32, #tpu.memory_space<smem>>
    %5 = vector.extract_strided_slice %1 {offsets = [0, 0, 0], sizes = [1, 16, 16], strides = [1, 1, 1]} : vector<4x18x18xf32> to vector<1x16x16xf32>
    %6 = vector.shape_cast %5 : vector<1x16x16xf32> to vector<16x16xf32>
    %7 = vector.broadcast %4 : f32 to vector<16x16xf32>
    %8 = arith.mulf %7, %6 : vector<16x16xf32>
    %9 = arith.addf %3, %8 : vector<16x16xf32>
    %c1 = arith.constant 1 : index
    %10 = memref.load %arg1[%c1] : memref<37xf32, #tpu.memory_space<smem>>
    %11 = vector.extract_strided_slice %1 {offsets = [0, 0, 1], sizes = [1, 16, 16], strides = [1, 1, 1]} : vector<4x18x18xf32> to vector<1x16x16xf32>
    %12 = vector.shape_cast %11 : vector<1x16x16xf32> to vector<16x16xf32>
    %13 = vector.broadcast %10 : f32 to vector<16x16xf32>
    %14 = arith.mulf %13, %12 : vector<16x16xf32>
    %15 = arith.addf %9, %14 : vector<16x16xf32>
    %c2 = arith.constant 2 : index
    %16 = memref.load %arg1[%c2] : memref<37xf32, #tpu.memory_space<smem>>
    %17 = vector.extract_strided_slice %1 {offsets = [0, 0, 2], sizes = [1, 16, 16], strides = [1, 1, 1]} : vector<4x18x18xf32> to vector<1x16x16xf32>
    %18 = vector.shape_cast %17 : vector<1x16x16xf32> to vector<16x16xf32>
    %19 = vector.broadcast %16 : f32 to vector<16x16xf32>
    %20 = arith.mulf %19, %18 : vector<16x16xf32>
    %21 = arith.addf %15, %20 : vector<16x16xf32>
    %c3 = arith.constant 3 : index
    %22 = memref.load %arg1[%c3] : memref<37xf32, #tpu.memory_space<smem>>
    %23 = vector.extract_strided_slice %1 {offsets = [0, 1, 0], sizes = [1, 16, 16], strides = [1, 1, 1]} : vector<4x18x18xf32> to vector<1x16x16xf32>
    %24 = vector.shape_cast %23 : vector<1x16x16xf32> to vector<16x16xf32>
    %25 = vector.broadcast %22 : f32 to vector<16x16xf32>
    %26 = arith.mulf %25, %24 : vector<16x16xf32>
    %27 = arith.addf %21, %26 : vector<16x16xf32>
    %c4 = arith.constant 4 : index
    %28 = memref.load %arg1[%c4] : memref<37xf32, #tpu.memory_space<smem>>
    %29 = vector.extract_strided_slice %1 {offsets = [0, 1, 1], sizes = [1, 16, 16], strides = [1, 1, 1]} : vector<4x18x18xf32> to vector<1x16x16xf32>
    %30 = vector.shape_cast %29 : vector<1x16x16xf32> to vector<16x16xf32>
    %31 = vector.broadcast %28 : f32 to vector<16x16xf32>
    %32 = arith.mulf %31, %30 : vector<16x16xf32>
    %33 = arith.addf %27, %32 : vector<16x16xf32>
    %c5 = arith.constant 5 : index
    %34 = memref.load %arg1[%c5] : memref<37xf32, #tpu.memory_space<smem>>
    %35 = vector.extract_strided_slice %1 {offsets = [0, 1, 2], sizes = [1, 16, 16], strides = [1, 1, 1]} : vector<4x18x18xf32> to vector<1x16x16xf32>
    %36 = vector.shape_cast %35 : vector<1x16x16xf32> to vector<16x16xf32>
    %37 = vector.broadcast %34 : f32 to vector<16x16xf32>
    %38 = arith.mulf %37, %36 : vector<16x16xf32>
    %39 = arith.addf %33, %38 : vector<16x16xf32>
    %c6 = arith.constant 6 : index
    %40 = memref.load %arg1[%c6] : memref<37xf32, #tpu.memory_space<smem>>
    %41 = vector.extract_strided_slice %1 {offsets = [0, 2, 0], sizes = [1, 16, 16], strides = [1, 1, 1]} : vector<4x18x18xf32> to vector<1x16x16xf32>
    %42 = vector.shape_cast %41 : vector<1x16x16xf32> to vector<16x16xf32>
    %43 = vector.broadcast %40 : f32 to vector<16x16xf32>
    %44 = arith.mulf %43, %42 : vector<16x16xf32>
    %45 = arith.addf %39, %44 : vector<16x16xf32>
    %c7 = arith.constant 7 : index
    %46 = memref.load %arg1[%c7] : memref<37xf32, #tpu.memory_space<smem>>
    %47 = vector.extract_strided_slice %1 {offsets = [0, 2, 1], sizes = [1, 16, 16], strides = [1, 1, 1]} : vector<4x18x18xf32> to vector<1x16x16xf32>
    %48 = vector.shape_cast %47 : vector<1x16x16xf32> to vector<16x16xf32>
    %49 = vector.broadcast %46 : f32 to vector<16x16xf32>
    %50 = arith.mulf %49, %48 : vector<16x16xf32>
    %51 = arith.addf %45, %50 : vector<16x16xf32>
    %c8 = arith.constant 8 : index
    %52 = memref.load %arg1[%c8] : memref<37xf32, #tpu.memory_space<smem>>
    %53 = vector.extract_strided_slice %1 {offsets = [0, 2, 2], sizes = [1, 16, 16], strides = [1, 1, 1]} : vector<4x18x18xf32> to vector<1x16x16xf32>
    %54 = vector.shape_cast %53 : vector<1x16x16xf32> to vector<16x16xf32>
    %55 = vector.broadcast %52 : f32 to vector<16x16xf32>
    %56 = arith.mulf %55, %54 : vector<16x16xf32>
    %57 = arith.addf %51, %56 : vector<16x16xf32>
    %c9 = arith.constant 9 : index
    %58 = memref.load %arg1[%c9] : memref<37xf32, #tpu.memory_space<smem>>
    %59 = vector.extract_strided_slice %1 {offsets = [1, 0, 0], sizes = [1, 16, 16], strides = [1, 1, 1]} : vector<4x18x18xf32> to vector<1x16x16xf32>
    %60 = vector.shape_cast %59 : vector<1x16x16xf32> to vector<16x16xf32>
    %61 = vector.broadcast %58 : f32 to vector<16x16xf32>
    %62 = arith.mulf %61, %60 : vector<16x16xf32>
    %63 = arith.addf %57, %62 : vector<16x16xf32>
    %c10 = arith.constant 10 : index
    %64 = memref.load %arg1[%c10] : memref<37xf32, #tpu.memory_space<smem>>
    %65 = vector.extract_strided_slice %1 {offsets = [1, 0, 1], sizes = [1, 16, 16], strides = [1, 1, 1]} : vector<4x18x18xf32> to vector<1x16x16xf32>
    %66 = vector.shape_cast %65 : vector<1x16x16xf32> to vector<16x16xf32>
    %67 = vector.broadcast %64 : f32 to vector<16x16xf32>
    %68 = arith.mulf %67, %66 : vector<16x16xf32>
    %69 = arith.addf %63, %68 : vector<16x16xf32>
    %c11 = arith.constant 11 : index
    %70 = memref.load %arg1[%c11] : memref<37xf32, #tpu.memory_space<smem>>
    %71 = vector.extract_strided_slice %1 {offsets = [1, 0, 2], sizes = [1, 16, 16], strides = [1, 1, 1]} : vector<4x18x18xf32> to vector<1x16x16xf32>
    %72 = vector.shape_cast %71 : vector<1x16x16xf32> to vector<16x16xf32>
    %73 = vector.broadcast %70 : f32 to vector<16x16xf32>
    %74 = arith.mulf %73, %72 : vector<16x16xf32>
    %75 = arith.addf %69, %74 : vector<16x16xf32>
    %c12 = arith.constant 12 : index
    %76 = memref.load %arg1[%c12] : memref<37xf32, #tpu.memory_space<smem>>
    %77 = vector.extract_strided_slice %1 {offsets = [1, 1, 0], sizes = [1, 16, 16], strides = [1, 1, 1]} : vector<4x18x18xf32> to vector<1x16x16xf32>
    %78 = vector.shape_cast %77 : vector<1x16x16xf32> to vector<16x16xf32>
    %79 = vector.broadcast %76 : f32 to vector<16x16xf32>
    %80 = arith.mulf %79, %78 : vector<16x16xf32>
    %81 = arith.addf %75, %80 : vector<16x16xf32>
    %c13 = arith.constant 13 : index
    %82 = memref.load %arg1[%c13] : memref<37xf32, #tpu.memory_space<smem>>
    %83 = vector.extract_strided_slice %1 {offsets = [1, 1, 1], sizes = [1, 16, 16], strides = [1, 1, 1]} : vector<4x18x18xf32> to vector<1x16x16xf32>
    %84 = vector.shape_cast %83 : vector<1x16x16xf32> to vector<16x16xf32>
    %85 = vector.broadcast %82 : f32 to vector<16x16xf32>
    %86 = arith.mulf %85, %84 : vector<16x16xf32>
    %87 = arith.addf %81, %86 : vector<16x16xf32>
    %c14 = arith.constant 14 : index
    %88 = memref.load %arg1[%c14] : memref<37xf32, #tpu.memory_space<smem>>
    %89 = vector.extract_strided_slice %1 {offsets = [1, 1, 2], sizes = [1, 16, 16], strides = [1, 1, 1]} : vector<4x18x18xf32> to vector<1x16x16xf32>
    %90 = vector.shape_cast %89 : vector<1x16x16xf32> to vector<16x16xf32>
    %91 = vector.broadcast %88 : f32 to vector<16x16xf32>
    %92 = arith.mulf %91, %90 : vector<16x16xf32>
    %93 = arith.addf %87, %92 : vector<16x16xf32>
    %c15 = arith.constant 15 : index
    %94 = memref.load %arg1[%c15] : memref<37xf32, #tpu.memory_space<smem>>
    %95 = vector.extract_strided_slice %1 {offsets = [1, 2, 0], sizes = [1, 16, 16], strides = [1, 1, 1]} : vector<4x18x18xf32> to vector<1x16x16xf32>
    %96 = vector.shape_cast %95 : vector<1x16x16xf32> to vector<16x16xf32>
    %97 = vector.broadcast %94 : f32 to vector<16x16xf32>
    %98 = arith.mulf %97, %96 : vector<16x16xf32>
    %99 = arith.addf %93, %98 : vector<16x16xf32>
    %c16 = arith.constant 16 : index
    %100 = memref.load %arg1[%c16] : memref<37xf32, #tpu.memory_space<smem>>
    %101 = vector.extract_strided_slice %1 {offsets = [1, 2, 1], sizes = [1, 16, 16], strides = [1, 1, 1]} : vector<4x18x18xf32> to vector<1x16x16xf32>
    %102 = vector.shape_cast %101 : vector<1x16x16xf32> to vector<16x16xf32>
    %103 = vector.broadcast %100 : f32 to vector<16x16xf32>
    %104 = arith.mulf %103, %102 : vector<16x16xf32>
    %105 = arith.addf %99, %104 : vector<16x16xf32>
    %c17 = arith.constant 17 : index
    %106 = memref.load %arg1[%c17] : memref<37xf32, #tpu.memory_space<smem>>
    %107 = vector.extract_strided_slice %1 {offsets = [1, 2, 2], sizes = [1, 16, 16], strides = [1, 1, 1]} : vector<4x18x18xf32> to vector<1x16x16xf32>
    %108 = vector.shape_cast %107 : vector<1x16x16xf32> to vector<16x16xf32>
    %109 = vector.broadcast %106 : f32 to vector<16x16xf32>
    %110 = arith.mulf %109, %108 : vector<16x16xf32>
    %111 = arith.addf %105, %110 : vector<16x16xf32>
    %c18 = arith.constant 18 : index
    %112 = memref.load %arg1[%c18] : memref<37xf32, #tpu.memory_space<smem>>
    %113 = vector.extract_strided_slice %1 {offsets = [2, 0, 0], sizes = [1, 16, 16], strides = [1, 1, 1]} : vector<4x18x18xf32> to vector<1x16x16xf32>
    %114 = vector.shape_cast %113 : vector<1x16x16xf32> to vector<16x16xf32>
    %115 = vector.broadcast %112 : f32 to vector<16x16xf32>
    %116 = arith.mulf %115, %114 : vector<16x16xf32>
    %117 = arith.addf %111, %116 : vector<16x16xf32>
    %c19 = arith.constant 19 : index
    %118 = memref.load %arg1[%c19] : memref<37xf32, #tpu.memory_space<smem>>
    %119 = vector.extract_strided_slice %1 {offsets = [2, 0, 1], sizes = [1, 16, 16], strides = [1, 1, 1]} : vector<4x18x18xf32> to vector<1x16x16xf32>
    %120 = vector.shape_cast %119 : vector<1x16x16xf32> to vector<16x16xf32>
    %121 = vector.broadcast %118 : f32 to vector<16x16xf32>
    %122 = arith.mulf %121, %120 : vector<16x16xf32>
    %123 = arith.addf %117, %122 : vector<16x16xf32>
    %c20 = arith.constant 20 : index
    %124 = memref.load %arg1[%c20] : memref<37xf32, #tpu.memory_space<smem>>
    %125 = vector.extract_strided_slice %1 {offsets = [2, 0, 2], sizes = [1, 16, 16], strides = [1, 1, 1]} : vector<4x18x18xf32> to vector<1x16x16xf32>
    %126 = vector.shape_cast %125 : vector<1x16x16xf32> to vector<16x16xf32>
    %127 = vector.broadcast %124 : f32 to vector<16x16xf32>
    %128 = arith.mulf %127, %126 : vector<16x16xf32>
    %129 = arith.addf %123, %128 : vector<16x16xf32>
    %c21 = arith.constant 21 : index
    %130 = memref.load %arg1[%c21] : memref<37xf32, #tpu.memory_space<smem>>
    %131 = vector.extract_strided_slice %1 {offsets = [2, 1, 0], sizes = [1, 16, 16], strides = [1, 1, 1]} : vector<4x18x18xf32> to vector<1x16x16xf32>
    %132 = vector.shape_cast %131 : vector<1x16x16xf32> to vector<16x16xf32>
    %133 = vector.broadcast %130 : f32 to vector<16x16xf32>
    %134 = arith.mulf %133, %132 : vector<16x16xf32>
    %135 = arith.addf %129, %134 : vector<16x16xf32>
    %c22 = arith.constant 22 : index
    %136 = memref.load %arg1[%c22] : memref<37xf32, #tpu.memory_space<smem>>
    %137 = vector.extract_strided_slice %1 {offsets = [2, 1, 1], sizes = [1, 16, 16], strides = [1, 1, 1]} : vector<4x18x18xf32> to vector<1x16x16xf32>
    %138 = vector.shape_cast %137 : vector<1x16x16xf32> to vector<16x16xf32>
    %139 = vector.broadcast %136 : f32 to vector<16x16xf32>
    %140 = arith.mulf %139, %138 : vector<16x16xf32>
    %141 = arith.addf %135, %140 : vector<16x16xf32>
    %c23 = arith.constant 23 : index
    %142 = memref.load %arg1[%c23] : memref<37xf32, #tpu.memory_space<smem>>
    %143 = vector.extract_strided_slice %1 {offsets = [2, 1, 2], sizes = [1, 16, 16], strides = [1, 1, 1]} : vector<4x18x18xf32> to vector<1x16x16xf32>
    %144 = vector.shape_cast %143 : vector<1x16x16xf32> to vector<16x16xf32>
    %145 = vector.broadcast %142 : f32 to vector<16x16xf32>
    %146 = arith.mulf %145, %144 : vector<16x16xf32>
    %147 = arith.addf %141, %146 : vector<16x16xf32>
    %c24 = arith.constant 24 : index
    %148 = memref.load %arg1[%c24] : memref<37xf32, #tpu.memory_space<smem>>
    %149 = vector.extract_strided_slice %1 {offsets = [2, 2, 0], sizes = [1, 16, 16], strides = [1, 1, 1]} : vector<4x18x18xf32> to vector<1x16x16xf32>
    %150 = vector.shape_cast %149 : vector<1x16x16xf32> to vector<16x16xf32>
    %151 = vector.broadcast %148 : f32 to vector<16x16xf32>
    %152 = arith.mulf %151, %150 : vector<16x16xf32>
    %153 = arith.addf %147, %152 : vector<16x16xf32>
    %c25 = arith.constant 25 : index
    %154 = memref.load %arg1[%c25] : memref<37xf32, #tpu.memory_space<smem>>
    %155 = vector.extract_strided_slice %1 {offsets = [2, 2, 1], sizes = [1, 16, 16], strides = [1, 1, 1]} : vector<4x18x18xf32> to vector<1x16x16xf32>
    %156 = vector.shape_cast %155 : vector<1x16x16xf32> to vector<16x16xf32>
    %157 = vector.broadcast %154 : f32 to vector<16x16xf32>
    %158 = arith.mulf %157, %156 : vector<16x16xf32>
    %159 = arith.addf %153, %158 : vector<16x16xf32>
    %c26 = arith.constant 26 : index
    %160 = memref.load %arg1[%c26] : memref<37xf32, #tpu.memory_space<smem>>
    %161 = vector.extract_strided_slice %1 {offsets = [2, 2, 2], sizes = [1, 16, 16], strides = [1, 1, 1]} : vector<4x18x18xf32> to vector<1x16x16xf32>
    %162 = vector.shape_cast %161 : vector<1x16x16xf32> to vector<16x16xf32>
    %163 = vector.broadcast %160 : f32 to vector<16x16xf32>
    %164 = arith.mulf %163, %162 : vector<16x16xf32>
    %165 = arith.addf %159, %164 : vector<16x16xf32>
    %c27 = arith.constant 27 : index
    %166 = memref.load %arg1[%c27] : memref<37xf32, #tpu.memory_space<smem>>
    %167 = vector.extract_strided_slice %1 {offsets = [3, 0, 0], sizes = [1, 16, 16], strides = [1, 1, 1]} : vector<4x18x18xf32> to vector<1x16x16xf32>
    %168 = vector.shape_cast %167 : vector<1x16x16xf32> to vector<16x16xf32>
    %169 = vector.broadcast %166 : f32 to vector<16x16xf32>
    %170 = arith.mulf %169, %168 : vector<16x16xf32>
    %171 = arith.addf %165, %170 : vector<16x16xf32>
    %c28 = arith.constant 28 : index
    %172 = memref.load %arg1[%c28] : memref<37xf32, #tpu.memory_space<smem>>
    %173 = vector.extract_strided_slice %1 {offsets = [3, 0, 1], sizes = [1, 16, 16], strides = [1, 1, 1]} : vector<4x18x18xf32> to vector<1x16x16xf32>
    %174 = vector.shape_cast %173 : vector<1x16x16xf32> to vector<16x16xf32>
    %175 = vector.broadcast %172 : f32 to vector<16x16xf32>
    %176 = arith.mulf %175, %174 : vector<16x16xf32>
    %177 = arith.addf %171, %176 : vector<16x16xf32>
    %c29 = arith.constant 29 : index
    %178 = memref.load %arg1[%c29] : memref<37xf32, #tpu.memory_space<smem>>
    %179 = vector.extract_strided_slice %1 {offsets = [3, 0, 2], sizes = [1, 16, 16], strides = [1, 1, 1]} : vector<4x18x18xf32> to vector<1x16x16xf32>
    %180 = vector.shape_cast %179 : vector<1x16x16xf32> to vector<16x16xf32>
    %181 = vector.broadcast %178 : f32 to vector<16x16xf32>
    %182 = arith.mulf %181, %180 : vector<16x16xf32>
    %183 = arith.addf %177, %182 : vector<16x16xf32>
    %c30 = arith.constant 30 : index
    %184 = memref.load %arg1[%c30] : memref<37xf32, #tpu.memory_space<smem>>
    %185 = vector.extract_strided_slice %1 {offsets = [3, 1, 0], sizes = [1, 16, 16], strides = [1, 1, 1]} : vector<4x18x18xf32> to vector<1x16x16xf32>
    %186 = vector.shape_cast %185 : vector<1x16x16xf32> to vector<16x16xf32>
    %187 = vector.broadcast %184 : f32 to vector<16x16xf32>
    %188 = arith.mulf %187, %186 : vector<16x16xf32>
    %189 = arith.addf %183, %188 : vector<16x16xf32>
    %c31 = arith.constant 31 : index
    %190 = memref.load %arg1[%c31] : memref<37xf32, #tpu.memory_space<smem>>
    %191 = vector.extract_strided_slice %1 {offsets = [3, 1, 1], sizes = [1, 16, 16], strides = [1, 1, 1]} : vector<4x18x18xf32> to vector<1x16x16xf32>
    %192 = vector.shape_cast %191 : vector<1x16x16xf32> to vector<16x16xf32>
    %193 = vector.broadcast %190 : f32 to vector<16x16xf32>
    %194 = arith.mulf %193, %192 : vector<16x16xf32>
    %195 = arith.addf %189, %194 : vector<16x16xf32>
    %c32 = arith.constant 32 : index
    %196 = memref.load %arg1[%c32] : memref<37xf32, #tpu.memory_space<smem>>
    %197 = vector.extract_strided_slice %1 {offsets = [3, 1, 2], sizes = [1, 16, 16], strides = [1, 1, 1]} : vector<4x18x18xf32> to vector<1x16x16xf32>
    %198 = vector.shape_cast %197 : vector<1x16x16xf32> to vector<16x16xf32>
    %199 = vector.broadcast %196 : f32 to vector<16x16xf32>
    %200 = arith.mulf %199, %198 : vector<16x16xf32>
    %201 = arith.addf %195, %200 : vector<16x16xf32>
    %c33 = arith.constant 33 : index
    %202 = memref.load %arg1[%c33] : memref<37xf32, #tpu.memory_space<smem>>
    %203 = vector.extract_strided_slice %1 {offsets = [3, 2, 0], sizes = [1, 16, 16], strides = [1, 1, 1]} : vector<4x18x18xf32> to vector<1x16x16xf32>
    %204 = vector.shape_cast %203 : vector<1x16x16xf32> to vector<16x16xf32>
    %205 = vector.broadcast %202 : f32 to vector<16x16xf32>
    %206 = arith.mulf %205, %204 : vector<16x16xf32>
    %207 = arith.addf %201, %206 : vector<16x16xf32>
    %c34 = arith.constant 34 : index
    %208 = memref.load %arg1[%c34] : memref<37xf32, #tpu.memory_space<smem>>
    %209 = vector.extract_strided_slice %1 {offsets = [3, 2, 1], sizes = [1, 16, 16], strides = [1, 1, 1]} : vector<4x18x18xf32> to vector<1x16x16xf32>
    %210 = vector.shape_cast %209 : vector<1x16x16xf32> to vector<16x16xf32>
    %211 = vector.broadcast %208 : f32 to vector<16x16xf32>
    %212 = arith.mulf %211, %210 : vector<16x16xf32>
    %213 = arith.addf %207, %212 : vector<16x16xf32>
    %c35 = arith.constant 35 : index
    %214 = memref.load %arg1[%c35] : memref<37xf32, #tpu.memory_space<smem>>
    %215 = vector.extract_strided_slice %1 {offsets = [3, 2, 2], sizes = [1, 16, 16], strides = [1, 1, 1]} : vector<4x18x18xf32> to vector<1x16x16xf32>
    %216 = vector.shape_cast %215 : vector<1x16x16xf32> to vector<16x16xf32>
    %217 = vector.broadcast %214 : f32 to vector<16x16xf32>
    %218 = arith.mulf %217, %216 : vector<16x16xf32>
    %219 = arith.addf %213, %218 : vector<16x16xf32>
    %cst = arith.constant 0.000000e+00 : f32
    %220 = vector.broadcast %cst : f32 to vector<16x16xf32>
    %221 = arith.maximumf %219, %220 : vector<16x16xf32>
    %c0_4 = arith.constant 0 : index
    %c0_5 = arith.constant 0 : index
    %c0_6 = arith.constant 0 : index
    %c0_7 = arith.constant 0 : index
    %222 = vector.load %arg3[%c0_4, %c0_5, %c0_6, %c0_7] : memref<1x1x16x16xf32, #tpu.memory_space<vmem>>, vector<1x1x16x16xf32>
    %223 = vector.shape_cast %222 : vector<1x1x16x16xf32> to vector<16x16xf32>
    %224 = vector.shape_cast %221 : vector<16x16xf32> to vector<1x1x16x16xf32>
    tpu.vector_store %arg3[%c0_4, %c0_5, %c0_6, %c0_7], %224 {strides = array<i32>} : memref<1x1x16x16xf32, #tpu.memory_space<vmem>>, vector<1x1x16x16xf32>,
    return
  }
  func.func @transform_0(%arg0: i32) -> i32 {
    %c0_i32 = arith.constant 0 : i32
    %c0_i32_0 = arith.constant 0 : i32
    return %c0_i32 : i32
  }
  func.func @transform_1(%arg0: i32) -> (i32, i32, i32, i32) {
    %c0_i32 = arith.constant 0 : i32
    %c0_i32_0 = arith.constant 0 : i32
    %c0_i32_1 = arith.constant 0 : i32
    %c0_i32_2 = arith.constant 0 : i32
    return %arg0, %c0_i32, %c0_i32_0, %c0_i32_1 : i32, i32, i32, i32
  }
  func.func @transform_2(%arg0: i32) -> (i32, i32, i32, i32) {
    %c0_i32 = arith.constant 0 : i32
    %c0_i32_0 = arith.constant 0 : i32
    %c0_i32_1 = arith.constant 0 : i32
    %c0_i32_2 = arith.constant 0 : i32
    return %arg0, %c0_i32, %c0_i32_0, %c0_i32_1 : i32, i32, i32, i32
  }
}

</mosaic_0001>

<llo_original>
// kernel: tpu_custom_call.1
$region0: #{tpu_custom_call.1}
  #allocation0 [shape = 'u32[]', space=smem, size = 0x4, offset = 0x4, fixed_abs, tag = 'smem constant byte address 0x4 - core index']
  #allocation1 [shape = 'u32[144,128]{1,0:T(1,128)}', space=vmem, size = 0x12000, scoped, tag = 'internal scratch']
  %s0 = inlined_call_operand.vmem [shape: f32[37], index: 0, kind: input, shape index: {}]
  %s1 = inlined_call_operand.vmem [shape: f32[2,4,18,18], index: 1, kind: input, shape index: {}]
  %s2 = inlined_call_operand.hbm [shape: f32[2,1,16,16], index: 2, kind: output, shape index: {}]
  %s3 = sld [smem:[#allocation0]]
  $region45: #{tpu_custom_call.1} parent=0
    _
  %s5 = ssub.s32 1, %s3
  %s6 = scalar_select 0, %s5, %s3
  $region1: #{tpu_custom_call.1} parent=0
    #allocation2 [shape = 'u8[512]{0}', space=smem, size = 0x200, scoped, tag = 'input window, operand 0, single buffered']
    #allocation3 [shape = 's32[2]{0}', space=sflag, size = 0x8, scoped, tag = 'scoped memory for tpu_custom_call.1']
    #allocation4 [shape = 's32[2]{0}', space=sflag, size = 0x8, scoped, tag = 'scoped memory for tpu_custom_call.1']
    #allocation5 [shape = 'u8[16384]{0}', space=vmem, size = 0x4000, scoped, tag = 'output window, operand 0']
    %7 = vsyncpa [#allocation4], 0
    %8 = vsyncpa [#allocation3], 0
    %s9 = scalar_lea.sflag [#allocation3], 1
    %10 = vsyncpa %s9, 0
    loop: start=0, step=1, limit=4
    $region2: #{tpu_custom_call.1} parent=1 // loop_pre_header
      _
    $region3: #{tpu_custom_call.1} parent=1 // loop_header
      %s12 = sphi 0, %s16
      %p13 = scmp.ge.s32.totalorder %s12, 4
      %s20 = sphi 0, %s20
      %s22 = sphi 0, %s20
      %s23 = sphi 0, %s22
      %s37 = sphi 0, %s23
      %s43 = sphi 0, %s45
      %s46 = sphi 0, %s43
      %s47 = sphi 0, %s46
      %s63 = sphi 0, %s47
      %s69 = sphi 0, %s71
      %s72 = sphi 0, %s69
      %s73 = sphi 0, %s72
      %s89 = sphi 0, %s73
    $region4: #{tpu_custom_call.1} parent=1 // loop_header_branch
      %15 = sbr.rel (%p13) target = $region8
    $region5: #{tpu_custom_call.1} parent=1 // loop_body
      %s17 = ssub.s32 %s12, 1
      %s18 = ssub.s32 %s12, 2
      %s19 = sadd.s32 %s12, 1
      %s21 = sadd.s32 %s20, 1
      %p24 = scmp.eq.s32.totalorder %s12, 1
      %p25 = scmp.ne.s32.totalorder %s20, %s22
      %p26 = scmp.eq.s32.totalorder %s12, 0
      %p27 = por %p25, %p26
      %p28 = scmp.ne.s32.totalorder %s20, %s22
      %p29 = scmp.eq.s32.totalorder %s17, 1
      %p30 = por %p28, %p29
      %p31 = scmp.ne.s32.totalorder %s22, %s23
      %p32 = scmp.eq.s32.totalorder %s17, 0
      %p33 = por %p31, %p32
      %p34 = scmp.ne.s32.totalorder %s22, %s23
      %p35 = scmp.eq.s32.totalorder %s18, 1
      %p36 = por %p34, %p35
      %p38 = scmp.ne.s32.totalorder %s23, %s37
      %p39 = scmp.eq.s32.totalorder %s18, 0
      %p40 = por %p38, %p39
      %s41 = ssub.s32 %s12, %s19
      %p42 = scmp.eq.s32.totalorder %s41, 0
      %s44 = sadd.s32 %s43, 1
      %s45 = scalar_select %p42, %s43, %s44
      %p48 = pneg %p42
      %p49 = scmp.eq.s32.totalorder %s12, 1
      %p50 = por %p48, %p49
      %p51 = scmp.ne.s32.totalorder %s43, %s46
      %p52 = scmp.eq.s32.totalorder %s12, 0
      %p53 = por %p51, %p52
      %p54 = scmp.ne.s32.totalorder %s43, %s46
      %p55 = scmp.eq.s32.totalorder %s17, 1
      %p56 = por %p54, %p55
      %p57 = scmp.ne.s32.totalorder %s46, %s47
      %p58 = scmp.eq.s32.totalorder %s17, 0
      %p59 = por %p57, %p58
      %p60 = scmp.ne.s32.totalorder %s46, %s47
      %p61 = scmp.eq.s32.totalorder %s18, 1
      %p62 = por %p60, %p61
      %p64 = scmp.ne.s32.totalorder %s47, %s63
      %p65 = scmp.eq.s32.totalorder %s18, 0
      %p66 = por %p64, %p65
      %s67 = ssub.s32 %s12, %s19
      %p68 = scmp.eq.s32.totalorder %s67, 0
      %s70 = sadd.s32 %s69, 1
      %s71 = scalar_select %p68, %s69, %s70
      %p74 = pneg %p68
      %p75 = scmp.eq.s32.totalorder %s12, 1
      %p76 = por %p74, %p75
      %p77 = scmp.ne.s32.totalorder %s69, %s72
      %p78 = scmp.eq.s32.totalorder %s12, 0
      %p79 = por %p77, %p78
      %p80 = scmp.ne.s32.totalorder %s69, %s72
      %p81 = scmp.eq.s32.totalorder %s17, 1
      %p82 = por %p80, %p81
      %p83 = scmp.ne.s32.totalorder %s72, %s73
      %p84 = scmp.eq.s32.totalorder %s17, 0
      %p85 = por %p83, %p84
      %p86 = scmp.ne.s32.totalorder %s72, %s73
      %p87 = scmp.eq.s32.totalorder %s18, 1
      %p88 = por %p86, %p87
      %p90 = scmp.ne.s32.totalorder %s73, %s89
      %p91 = scmp.eq.s32.totalorder %s18, 0
      %p92 = por %p90, %p91
      %p93 = scmp.le.s32.totalorder 1, %s12
      %p94 = scmp.lt.s32.totalorder %s12, 3
      %p95 = pnand %p93, %p94
      %p96 = pneg %p95
      // Predicated region
      $region9: #{tpu_custom_call.1} parent=5 // pred_check
        _
      $region10: #{tpu_custom_call.1} parent=5 // pred_check_branch
        %98 = sbr.rel (%p95) target = $region12
      $region11: #{tpu_custom_call.1} parent=5 // pred_region
        %s99 = ssub.s32 %s12, 1
        // Predicated region
        $region13: #{tpu_custom_call.1} parent=11 // pred_check
          %p100 = pneg %p33
        $region14: #{tpu_custom_call.1} parent=11 // pred_check_branch
          %102 = sbr.rel (%p100) target = $region16
        $region15: #{tpu_custom_call.1} parent=11 // pred_region
          %s104 = ssub.s32 16, 16
          %105 = vsyncadd [#allocation4], %s104
          %s107 = sshll.u32 %s0, 4
          %s108 = int_to_ptr.vmem [resolvable:$true] %s107
          %110 = dma.vmem_to_smem %s108, 16, [#allocation2], [#allocation4]
        $region16: #{tpu_custom_call.1} parent=11 // pred_fallthru
          _
      $region12: #{tpu_custom_call.1} parent=5 // pred_fallthru
        _
      %p111 = scmp.lt.s32.totalorder %s12, 2
      // Predicated region
      $region17: #{tpu_custom_call.1} parent=5 // pred_check
        %p112 = pneg %p111
      $region18: #{tpu_custom_call.1} parent=5 // pred_check_branch
        %114 = sbr.rel (%p112) target = $region20
      $region19: #{tpu_custom_call.1} parent=5 // pred_region
        // Predicated region
        $region21: #{tpu_custom_call.1} parent=19 // pred_check
          %p115 = pneg %p53
        $region22: #{tpu_custom_call.1} parent=19 // pred_check_branch
          %117 = sbr.rel (%p115) target = $region24
        $region23: #{tpu_custom_call.1} parent=19 // pred_region
          %p118 = scmp.lt.s32.totalorder %s12, 1
          %s119 = scalar_select %p118, %s12, 1
          %s120 = smul.addr %s119, 12
          %s121 = smul.addr %s120, 8
          %s122 = scalar_lea.vmem %s1, %s121
        $region24: #{tpu_custom_call.1} parent=19 // pred_fallthru
          _
      $region20: #{tpu_custom_call.1} parent=5 // pred_fallthru
        _
      %p123 = scmp.le.s32.totalorder 1, %s12
      %p124 = scmp.lt.s32.totalorder %s12, 3
      %p125 = pnand %p123, %p124
      %p126 = pneg %p125
      // Predicated region
      $region25: #{tpu_custom_call.1} parent=5 // pred_check
        _
      $region26: #{tpu_custom_call.1} parent=5 // pred_check_branch
        %128 = sbr.rel (%p125) target = $region28
      $region27: #{tpu_custom_call.1} parent=5 // pred_region
        %s129 = ssub.s32 %s12, 1
        // Predicated region
        $region29: #{tpu_custom_call.1} parent=27 // pred_check
          %p130 = pneg %p33
        $region30: #{tpu_custom_call.1} parent=27 // pred_check_branch
          %132 = sbr.rel (%p130) target = $region32
        $region31: #{tpu_custom_call.1} parent=27 // pred_region
          %133 = dma.done [#allocation4], 16
        $region32: #{tpu_custom_call.1} parent=27 // pred_fallthru
          _
        %134 = sfence
        %p135 = pneg %p33
        %p136 = pneg %p30
        %p137 = scmp.lt.s32.totalorder %s17, 1
        %s138 = scalar_select %p137, %s17, 1
        %s139 = smul.addr %s138, 12
        %s140 = smul.addr %s139, 8
        %s141 = scalar_lea.vmem %s1, %s140
        %p142 = pneg %p59
        %p143 = pneg %p56
        %p144 = pneg %p85
        %p145 = pneg %p82
        %s146 = sand.u32 %s72, 1
        %s147 = scalar_lea.sflag [#allocation3], %s146
        %s148 = sand.u32 %s72, 1
        %s149 = smul.addr %s148, 16
        %s150 = scalar_lea.vmem [#allocation5], %s149
        %p151 = scmp.lt.s32.totalorder %s17, 1
        %s152 = scalar_select %p151, %s17, 1
        %s153 = smul.addr %s152, 12
        %s154 = smul.addr %s153, 8
        %s155 = scalar_lea.vmem %s1, %s154
        %v156 = vld [vmem:[%s155] sm:$0xff]
        %v157 = vld [vmem:[%s155 + $0x8] sm:$0xff]
        %v158 = vld [vmem:[%s155 + $0x10] sm:$0x3]
        %v159 = vld [vmem:[%s155 + $0x18] sm:$0xff]
        %v160 = vld [vmem:[%s155 + $0x20] sm:$0xff]
        %v161 = vld [vmem:[%s155 + $0x28] sm:$0x3]
        %v162 = vld [vmem:[%s155 + $0x30] sm:$0xff]
        %v163 = vld [vmem:[%s155 + $0x38] sm:$0xff]
        %v164 = vld [vmem:[%s155 + $0x40] sm:$0x3]
        %v165 = vld [vmem:[%s155 + $0x48] sm:$0xff]
        %v166 = vld [vmem:[%s155 + $0x50] sm:$0xff]
        %v167 = vld [vmem:[%s155 + $0x58] sm:$0x3]
        %s168 = sld [smem:[#allocation2 + $0x24]]
        %v169 = vstv %s168
        %s170 = sld [smem:[#allocation2]]
        %v171 = vstv %s170
        %v172 = vmul.f32 %v171, %v156
        %v173 = vmul.f32 %v171, %v157
        %v174 = vadd.f32 %v169, %v172
        %v175 = vadd.f32 %v169, %v173
        %s176 = sld [smem:[#allocation2 + $0x1]]
        %v177 = vstv %s176
        %v178 = vmul.f32 %v177, %v156
        %v179 = vmul.f32 %v177, %v157
        %182 = vrot.lane.b32.xlu0 %v178, 127
        %v183 = vpop.permute.xlu0 %182
        %184 = vrot.lane.b32.xlu0 %v179, 127
        %v185 = vpop.permute.xlu0 %184
        %v188 = vadd.f32 %v174, %v183
        %v189 = vadd.f32 %v175, %v185
        %s190 = sld [smem:[#allocation2 + $0x2]]
        %v191 = vstv %s190
        %v192 = vmul.f32 %v191, %v156
        %v193 = vmul.f32 %v191, %v157
        %196 = vrot.lane.b32.xlu0 %v192, 126
        %v197 = vpop.permute.xlu0 %196
        %198 = vrot.lane.b32.xlu0 %v193, 126
        %v199 = vpop.permute.xlu0 %198
        %v202 = vadd.f32 %v188, %v197
        %v203 = vadd.f32 %v189, %v199
        %s204 = sld [smem:[#allocation2 + $0x3]]
        %v205 = vstv %s204
        %v206 = vmul.f32 %v205, %v156
        %v207 = vmul.f32 %v205, %v157
        %v208 = vmul.f32 %v205, %v158
        %vm212 = vcmask 1046528
        %v213 = vrot.slane %v206, 1
        %v214 = vrot.slane %v207, 1
        %v215 = vsel %vm212, %v213, %v214
        %v216 = vrot.slane %v208, 1
        %v217 = vsel %vm212, %v214, %v216
        %v220 = vadd.f32 %v202, %v215
        %v221 = vadd.f32 %v203, %v217
        %s222 = sld [smem:[#allocation2 + $0x4]]
        %v223 = vstv %s222
        %v224 = vmul.f32 %v223, %v156
        %v225 = vmul.f32 %v223, %v157
        %v226 = vmul.f32 %v223, %v158
        %v230 = vrot.slane %v224, 1
        %v231 = vrot.slane %v225, 1
        %v232 = vsel %vm212, %v230, %v231
        %v233 = vrot.slane %v226, 1
        %v234 = vsel %vm212, %v231, %v233
        %235 = vrot.lane.b32.xlu0 %v232, 127
        %v236 = vpop.permute.xlu0 %235
        %237 = vrot.lane.b32.xlu0 %v234, 127
        %v238 = vpop.permute.xlu0 %237
        %v241 = vadd.f32 %v220, %v236
        %v242 = vadd.f32 %v221, %v238
        %s243 = sld [smem:[#allocation2 + $0x5]]
        %v244 = vstv %s243
        %v245 = vmul.f32 %v244, %v156
        %v246 = vmul.f32 %v244, %v157
        %v247 = vmul.f32 %v244, %v158
        %v251 = vrot.slane %v245, 1
        %v252 = vrot.slane %v246, 1
        %v253 = vsel %vm212, %v251, %v252
        %v254 = vrot.slane %v247, 1
        %v255 = vsel %vm212, %v252, %v254
        %256 = vrot.lane.b32.xlu0 %v253, 126
        %v257 = vpop.permute.xlu0 %256
        %258 = vrot.lane.b32.xlu0 %v255, 126
        %v259 = vpop.permute.xlu0 %258
        %v262 = vadd.f32 %v241, %v257
        %v263 = vadd.f32 %v242, %v259
        %s264 = sld [smem:[#allocation2 + $0x6]]
        %v265 = vstv %s264
        %v266 = vmul.f32 %v265, %v156
        %v267 = vmul.f32 %v265, %v157
        %v268 = vmul.f32 %v265, %v158
        %vm272 = vcmask 1045504
        %v273 = vrot.slane %v266, 2
        %v274 = vrot.slane %v267, 2
        %v275 = vsel %vm272, %v273, %v274
        %v276 = vrot.slane %v268, 2
        %v277 = vsel %vm272, %v274, %v276
        %v280 = vadd.f32 %v262, %v275
        %v281 = vadd.f32 %v263, %v277
        %s282 = sld [smem:[#allocation2 + $0x7]]
        %v283 = vstv %s282
        %v284 = vmul.f32 %v283, %v156
        %v285 = vmul.f32 %v283, %v157
        %v286 = vmul.f32 %v283, %v158
        %v290 = vrot.slane %v284, 2
        %v291 = vrot.slane %v285, 2
        %v292 = vsel %vm272, %v290, %v291
        %v293 = vrot.slane %v286, 2
        %v294 = vsel %vm272, %v291, %v293
        %295 = vrot.lane.b32.xlu0 %v292, 127
        %v296 = vpop.permute.xlu0 %295
        %297 = vrot.lane.b32.xlu0 %v294, 127
        %v298 = vpop.permute.xlu0 %297
        %v301 = vadd.f32 %v280, %v296
        %v302 = vadd.f32 %v281, %v298
        %s303 = sld [smem:[#allocation2 + $0x8]]
        %v304 = vstv %s303
        %v305 = vmul.f32 %v304, %v156
        %v306 = vmul.f32 %v304, %v157
        %v307 = vmul.f32 %v304, %v158
        %v311 = vrot.slane %v305, 2
        %v312 = vrot.slane %v306, 2
        %v313 = vsel %vm272, %v311, %v312
        %v314 = vrot.slane %v307, 2
        %v315 = vsel %vm272, %v312, %v314
        %316 = vrot.lane.b32.xlu0 %v313, 126
        %v317 = vpop.permute.xlu0 %316
        %318 = vrot.lane.b32.xlu0 %v315, 126
        %v319 = vpop.permute.xlu0 %318
        %v322 = vadd.f32 %v301, %v317
        %v323 = vadd.f32 %v302, %v319
        %s324 = sld [smem:[#allocation2 + $0x9]]
        %v325 = vstv %s324
        %v326 = vmul.f32 %v325, %v159
        %v327 = vmul.f32 %v325, %v160
        %v328 = vadd.f32 %v322, %v326
        %v329 = vadd.f32 %v323, %v327
        %s330 = sld [smem:[#allocation2 + $0xa]]
        %v331 = vstv %s330
        %v332 = vmul.f32 %v331, %v159
        %v333 = vmul.f32 %v331, %v160
        %336 = vrot.lane.b32.xlu0 %v332, 127
        %v337 = vpop.permute.xlu0 %336
        %338 = vrot.lane.b32.xlu0 %v333, 127
        %v339 = vpop.permute.xlu0 %338
        %v342 = vadd.f32 %v328, %v337
        %v343 = vadd.f32 %v329, %v339
        %s344 = sld [smem:[#allocation2 + $0xb]]
        %v345 = vstv %s344
        %v346 = vmul.f32 %v345, %v159
        %v347 = vmul.f32 %v345, %v160
        %350 = vrot.lane.b32.xlu0 %v346, 126
        %v351 = vpop.permute.xlu0 %350
        %352 = vrot.lane.b32.xlu0 %v347, 126
        %v353 = vpop.permute.xlu0 %352
        %v356 = vadd.f32 %v342, %v351
        %v357 = vadd.f32 %v343, %v353
        %s358 = sld [smem:[#allocation2 + $0xc]]
        %v359 = vstv %s358
        %v360 = vmul.f32 %v359, %v159
        %v361 = vmul.f32 %v359, %v160
        %v362 = vmul.f32 %v359, %v161
        %v366 = vrot.slane %v360, 1
        %v367 = vrot.slane %v361, 1
        %v368 = vsel %vm212, %v366, %v367
        %v369 = vrot.slane %v362, 1
        %v370 = vsel %vm212, %v367, %v369
        %v373 = vadd.f32 %v356, %v368
        %v374 = vadd.f32 %v357, %v370
        %s375 = sld [smem:[#allocation2 + $0xd]]
        %v376 = vstv %s375
        %v377 = vmul.f32 %v376, %v159
        %v378 = vmul.f32 %v376, %v160
        %v379 = vmul.f32 %v376, %v161
        %v383 = vrot.slane %v377, 1
        %v384 = vrot.slane %v378, 1
        %v385 = vsel %vm212, %v383, %v384
        %v386 = vrot.slane %v379, 1
        %v387 = vsel %vm212, %v384, %v386
        %388 = vrot.lane.b32.xlu0 %v385, 127
        %v389 = vpop.permute.xlu0 %388
        %390 = vrot.lane.b32.xlu0 %v387, 127
        %v391 = vpop.permute.xlu0 %390
        %v394 = vadd.f32 %v373, %v389
        %v395 = vadd.f32 %v374, %v391
        %s396 = sld [smem:[#allocation2 + $0xe]]
        %v397 = vstv %s396
        %v398 = vmul.f32 %v397, %v159
        %v399 = vmul.f32 %v397, %v160
        %v400 = vmul.f32 %v397, %v161
        %v404 = vrot.slane %v398, 1
        %v405 = vrot.slane %v399, 1
        %v406 = vsel %vm212, %v404, %v405
        %v407 = vrot.slane %v400, 1
        %v408 = vsel %vm212, %v405, %v407
        %409 = vrot.lane.b32.xlu0 %v406, 126
        %v410 = vpop.permute.xlu0 %409
        %411 = vrot.lane.b32.xlu0 %v408, 126
        %v412 = vpop.permute.xlu0 %411
        %v415 = vadd.f32 %v394, %v410
        %v416 = vadd.f32 %v395, %v412
        %s417 = sld [smem:[#allocation2 + $0xf]]
        %v418 = vstv %s417
        %v419 = vmul.f32 %v418, %v159
        %v420 = vmul.f32 %v418, %v160
        %v421 = vmul.f32 %v418, %v161
        %v425 = vrot.slane %v419, 2
        %v426 = vrot.slane %v420, 2
        %v427 = vsel %vm272, %v425, %v426
        %v428 = vrot.slane %v421, 2
        %v429 = vsel %vm272, %v426, %v428
        %v432 = vadd.f32 %v415, %v427
        %v433 = vadd.f32 %v416, %v429
        %s434 = sld [smem:[#allocation2 + $0x10]]
        %v435 = vstv %s434
        %v436 = vmul.f32 %v435, %v159
        %v437 = vmul.f32 %v435, %v160
        %v438 = vmul.f32 %v435, %v161
        %v442 = vrot.slane %v436, 2
        %v443 = vrot.slane %v437, 2
        %v444 = vsel %vm272, %v442, %v443
        %v445 = vrot.slane %v438, 2
        %v446 = vsel %vm272, %v443, %v445
        %447 = vrot.lane.b32.xlu0 %v444, 127
        %v448 = vpop.permute.xlu0 %447
        %449 = vrot.lane.b32.xlu0 %v446, 127
        %v450 = vpop.permute.xlu0 %449
        %v453 = vadd.f32 %v432, %v448
        %v454 = vadd.f32 %v433, %v450
        %s455 = sld [smem:[#allocation2 + $0x11]]
        %v456 = vstv %s455
        %v457 = vmul.f32 %v456, %v159
        %v458 = vmul.f32 %v456, %v160
        %v459 = vmul.f32 %v456, %v161
        %v463 = vrot.slane %v457, 2
        %v464 = vrot.slane %v458, 2
        %v465 = vsel %vm272, %v463, %v464
        %v466 = vrot.slane %v459, 2
        %v467 = vsel %vm272, %v464, %v466
        %468 = vrot.lane.b32.xlu0 %v465, 126
        %v469 = vpop.permute.xlu0 %468
        %470 = vrot.lane.b32.xlu0 %v467, 126
        %v471 = vpop.permute.xlu0 %470
        %v474 = vadd.f32 %v453, %v469
        %v475 = vadd.f32 %v454, %v471
        %s476 = sld [smem:[#allocation2 + $0x12]]
        %v477 = vstv %s476
        %v478 = vmul.f32 %v477, %v162
        %v479 = vmul.f32 %v477, %v163
        %v480 = vadd.f32 %v474, %v478
        %v481 = vadd.f32 %v475, %v479
        %s482 = sld [smem:[#allocation2 + $0x13]]
        %v483 = vstv %s482
        %v484 = vmul.f32 %v483, %v162
        %v485 = vmul.f32 %v483, %v163
        %488 = vrot.lane.b32.xlu0 %v484, 127
        %v489 = vpop.permute.xlu0 %488
        %490 = vrot.lane.b32.xlu0 %v485, 127
        %v491 = vpop.permute.xlu0 %490
        %v494 = vadd.f32 %v480, %v489
        %v495 = vadd.f32 %v481, %v491
        %s496 = sld [smem:[#allocation2 + $0x14]]
        %v497 = vstv %s496
        %v498 = vmul.f32 %v497, %v162
        %v499 = vmul.f32 %v497, %v163
        %502 = vrot.lane.b32.xlu0 %v498, 126
        %v503 = vpop.permute.xlu0 %502
        %504 = vrot.lane.b32.xlu0 %v499, 126
        %v505 = vpop.permute.xlu0 %504
        %v508 = vadd.f32 %v494, %v503
        %v509 = vadd.f32 %v495, %v505
        %s510 = sld [smem:[#allocation2 + $0x15]]
        %v511 = vstv %s510
        %v512 = vmul.f32 %v511, %v162
        %v513 = vmul.f32 %v511, %v163
        %v514 = vmul.f32 %v511, %v164
        %v518 = vrot.slane %v512, 1
        %v519 = vrot.slane %v513, 1
        %v520 = vsel %vm212, %v518, %v519
        %v521 = vrot.slane %v514, 1
        %v522 = vsel %vm212, %v519, %v521
        %v525 = vadd.f32 %v508, %v520
        %v526 = vadd.f32 %v509, %v522
        %s527 = sld [smem:[#allocation2 + $0x16]]
        %v528 = vstv %s527
        %v529 = vmul.f32 %v528, %v162
        %v530 = vmul.f32 %v528, %v163
        %v531 = vmul.f32 %v528, %v164
        %v535 = vrot.slane %v529, 1
        %v536 = vrot.slane %v530, 1
        %v537 = vsel %vm212, %v535, %v536
        %v538 = vrot.slane %v531, 1
        %v539 = vsel %vm212, %v536, %v538
        %540 = vrot.lane.b32.xlu0 %v537, 127
        %v541 = vpop.permute.xlu0 %540
        %542 = vrot.lane.b32.xlu0 %v539, 127
        %v543 = vpop.permute.xlu0 %542
        %v546 = vadd.f32 %v525, %v541
        %v547 = vadd.f32 %v526, %v543
        %s548 = sld [smem:[#allocation2 + $0x17]]
        %v549 = vstv %s548
        %v550 = vmul.f32 %v549, %v162
        %v551 = vmul.f32 %v549, %v163
        %v552 = vmul.f32 %v549, %v164
        %v556 = vrot.slane %v550, 1
        %v557 = vrot.slane %v551, 1
        %v558 = vsel %vm212, %v556, %v557
        %v559 = vrot.slane %v552, 1
        %v560 = vsel %vm212, %v557, %v559
        %561 = vrot.lane.b32.xlu0 %v558, 126
        %v562 = vpop.permute.xlu0 %561
        %563 = vrot.lane.b32.xlu0 %v560, 126
        %v564 = vpop.permute.xlu0 %563
        %v567 = vadd.f32 %v546, %v562
        %v568 = vadd.f32 %v547, %v564
        %s569 = sld [smem:[#allocation2 + $0x18]]
        %v570 = vstv %s569
        %v571 = vmul.f32 %v570, %v162
        %v572 = vmul.f32 %v570, %v163
        %v573 = vmul.f32 %v570, %v164
        %v577 = vrot.slane %v571, 2
        %v578 = vrot.slane %v572, 2
        %v579 = vsel %vm272, %v577, %v578
        %v580 = vrot.slane %v573, 2
        %v581 = vsel %vm272, %v578, %v580
        %v584 = vadd.f32 %v567, %v579
        %v585 = vadd.f32 %v568, %v581
        %s586 = sld [smem:[#allocation2 + $0x19]]
        %v587 = vstv %s586
        %v588 = vmul.f32 %v587, %v162
        %v589 = vmul.f32 %v587, %v163
        %v590 = vmul.f32 %v587, %v164
        %v594 = vrot.slane %v588, 2
        %v595 = vrot.slane %v589, 2
        %v596 = vsel %vm272, %v594, %v595
        %v597 = vrot.slane %v590, 2
        %v598 = vsel %vm272, %v595, %v597
        %599 = vrot.lane.b32.xlu0 %v596, 127
        %v600 = vpop.permute.xlu0 %599
        %601 = vrot.lane.b32.xlu0 %v598, 127
        %v602 = vpop.permute.xlu0 %601
        %v605 = vadd.f32 %v584, %v600
        %v606 = vadd.f32 %v585, %v602
        %s607 = sld [smem:[#allocation2 + $0x1a]]
        %v608 = vstv %s607
        %v609 = vmul.f32 %v608, %v162
        %v610 = vmul.f32 %v608, %v163
        %v611 = vmul.f32 %v608, %v164
        %v615 = vrot.slane %v609, 2
        %v616 = vrot.slane %v610, 2
        %v617 = vsel %vm272, %v615, %v616
        %v618 = vrot.slane %v611, 2
        %v619 = vsel %vm272, %v616, %v618
        %620 = vrot.lane.b32.xlu0 %v617, 126
        %v621 = vpop.permute.xlu0 %620
        %622 = vrot.lane.b32.xlu0 %v619, 126
        %v623 = vpop.permute.xlu0 %622
        %v626 = vadd.f32 %v605, %v621
        %v627 = vadd.f32 %v606, %v623
        %s628 = sld [smem:[#allocation2 + $0x1b]]
        %v629 = vstv %s628
        %v630 = vmul.f32 %v629, %v165
        %v631 = vmul.f32 %v629, %v166
        %v632 = vadd.f32 %v626, %v630
        %v633 = vadd.f32 %v627, %v631
        %s634 = sld [smem:[#allocation2 + $0x1c]]
        %v635 = vstv %s634
        %v636 = vmul.f32 %v635, %v165
        %v637 = vmul.f32 %v635, %v166
        %640 = vrot.lane.b32.xlu0 %v636, 127
        %v641 = vpop.permute.xlu0 %640
        %642 = vrot.lane.b32.xlu0 %v637, 127
        %v643 = vpop.permute.xlu0 %642
        %v646 = vadd.f32 %v632, %v641
        %v647 = vadd.f32 %v633, %v643
        %s648 = sld [smem:[#allocation2 + $0x1d]]
        %v649 = vstv %s648
        %v650 = vmul.f32 %v649, %v165
        %v651 = vmul.f32 %v649, %v166
        %654 = vrot.lane.b32.xlu0 %v650, 126
        %v655 = vpop.permute.xlu0 %654
        %656 = vrot.lane.b32.xlu0 %v651, 126
        %v657 = vpop.permute.xlu0 %656
        %v660 = vadd.f32 %v646, %v655
        %v661 = vadd.f32 %v647, %v657
        %s662 = sld [smem:[#allocation2 + $0x1e]]
        %v663 = vstv %s662
        %v664 = vmul.f32 %v663, %v165
        %v665 = vmul.f32 %v663, %v166
        %v666 = vmul.f32 %v663, %v167
        %v670 = vrot.slane %v664, 1
        %v671 = vrot.slane %v665, 1
        %v672 = vsel %vm212, %v670, %v671
        %v673 = vrot.slane %v666, 1
        %v674 = vsel %vm212, %v671, %v673
        %v677 = vadd.f32 %v660, %v672
        %v678 = vadd.f32 %v661, %v674
        %s679 = sld [smem:[#allocation2 + $0x1f]]
        %v680 = vstv %s679
        %v681 = vmul.f32 %v680, %v165
        %v682 = vmul.f32 %v680, %v166
        %v683 = vmul.f32 %v680, %v167
        %v687 = vrot.slane %v681, 1
        %v688 = vrot.slane %v682, 1
        %v689 = vsel %vm212, %v687, %v688
        %v690 = vrot.slane %v683, 1
        %v691 = vsel %vm212, %v688, %v690
        %692 = vrot.lane.b32.xlu0 %v689, 127
        %v693 = vpop.permute.xlu0 %692
        %694 = vrot.lane.b32.xlu0 %v691, 127
        %v695 = vpop.permute.xlu0 %694
        %v698 = vadd.f32 %v677, %v693
        %v699 = vadd.f32 %v678, %v695
        %s700 = sld [smem:[#allocation2 + $0x20]]
        %v701 = vstv %s700
        %v702 = vmul.f32 %v701, %v165
        %v703 = vmul.f32 %v701, %v166
        %v704 = vmul.f32 %v701, %v167
        %v708 = vrot.slane %v702, 1
        %v709 = vrot.slane %v703, 1
        %v710 = vsel %vm212, %v708, %v709
        %v711 = vrot.slane %v704, 1
        %v712 = vsel %vm212, %v709, %v711
        %713 = vrot.lane.b32.xlu0 %v710, 126
        %v714 = vpop.permute.xlu0 %713
        %715 = vrot.lane.b32.xlu0 %v712, 126
        %v716 = vpop.permute.xlu0 %715
        %v719 = vadd.f32 %v698, %v714
        %v720 = vadd.f32 %v699, %v716
        %s721 = sld [smem:[#allocation2 + $0x21]]
        %v722 = vstv %s721
        %v723 = vmul.f32 %v722, %v165
        %v724 = vmul.f32 %v722, %v166
        %v725 = vmul.f32 %v722, %v167
        %v729 = vrot.slane %v723, 2
        %v730 = vrot.slane %v724, 2
        %v731 = vsel %vm272, %v729, %v730
        %v732 = vrot.slane %v725, 2
        %v733 = vsel %vm272, %v730, %v732
        %v736 = vadd.f32 %v719, %v731
        %v737 = vadd.f32 %v720, %v733
        %s738 = sld [smem:[#allocation2 + $0x22]]
        %v739 = vstv %s738
        %v740 = vmul.f32 %v739, %v165
        %v741 = vmul.f32 %v739, %v166
        %v742 = vmul.f32 %v739, %v167
        %v746 = vrot.slane %v740, 2
        %v747 = vrot.slane %v741, 2
        %v748 = vsel %vm272, %v746, %v747
        %v749 = vrot.slane %v742, 2
        %v750 = vsel %vm272, %v747, %v749
        %751 = vrot.lane.b32.xlu0 %v748, 127
        %v752 = vpop.permute.xlu0 %751
        %753 = vrot.lane.b32.xlu0 %v750, 127
        %v754 = vpop.permute.xlu0 %753
        %v757 = vadd.f32 %v736, %v752
        %v758 = vadd.f32 %v737, %v754
        %s759 = sld [smem:[#allocation2 + $0x23]]
        %v760 = vstv %s759
        %v761 = vmul.f32 %v760, %v165
        %v762 = vmul.f32 %v760, %v166
        %v763 = vmul.f32 %v760, %v167
        %v767 = vrot.slane %v761, 2
        %v768 = vrot.slane %v762, 2
        %v769 = vsel %vm272, %v767, %v768
        %v770 = vrot.slane %v763, 2
        %v771 = vsel %vm272, %v768, %v770
        %772 = vrot.lane.b32.xlu0 %v769, 126
        %v773 = vpop.permute.xlu0 %772
        %774 = vrot.lane.b32.xlu0 %v771, 126
        %v775 = vpop.permute.xlu0 %774
        %v778 = vadd.f32 %v757, %v773
        %v779 = vadd.f32 %v758, %v775
        %v780 = vmax.f32 %v778, 0.0
        %v781 = vmax.f32 %v779, 0.0
        %vm782 = vcmask 130048
        %783 = vst.msk [vmem:[%s150] sm:$0xff] %vm782, %v780
        %784 = vst.msk [vmem:[%s150 + $0x8] sm:$0xff] %vm782, %v781
        %s785 = sand.u32 %s72, 1
        %s786 = scalar_lea.sflag [#allocation3], %s785
        %s787 = sand.u32 %s72, 1
        %s788 = smul.addr %s787, 16
        %s789 = scalar_lea.vmem [#allocation5], %s788
        // Predicated region
        $region33: #{tpu_custom_call.1} parent=27 // pred_check
          %p790 = pneg %p82
        $region34: #{tpu_custom_call.1} parent=27 // pred_check_branch
          %792 = sbr.rel (%p790) target = $region36
        $region35: #{tpu_custom_call.1} parent=27 // pred_region
          %s794 = ssub.s32 256, 256
          %795 = vsyncadd %s786, %s794
          %s796 = smul.addr %s17, 2
          %s797 = smul.addr %s796, 128
          %s798 = scalar_lea.hbm %s2, %s797
          %s799 = sshll.u32 %s789, 4
          %s800 = int_to_ptr.vmem [resolvable:$true] %s799
          %805 = dma.vmem_to_hbm [thread:$0]  %s800, 256, %s798, %s786, 128, 128, 8
        $region36: #{tpu_custom_call.1} parent=27 // pred_fallthru
          _
      $region28: #{tpu_custom_call.1} parent=5 // pred_fallthru
        _
      %p806 = scmp.le.s32.totalorder 2, %s12
      // Predicated region
      $region37: #{tpu_custom_call.1} parent=5 // pred_check
        %p807 = pneg %p806
      $region38: #{tpu_custom_call.1} parent=5 // pred_check_branch
        %809 = sbr.rel (%p807) target = $region40
      $region39: #{tpu_custom_call.1} parent=5 // pred_region
        %s810 = ssub.s32 %s12, 2
        // Predicated region
        $region41: #{tpu_custom_call.1} parent=39 // pred_check
          %p811 = pneg %p88
        $region42: #{tpu_custom_call.1} parent=39 // pred_check_branch
          %813 = sbr.rel (%p811) target = $region44
        $region43: #{tpu_custom_call.1} parent=39 // pred_region
          %s814 = sand.u32 %s73, 1
          %s815 = scalar_lea.sflag [#allocation3], %s814
          %s816 = sand.u32 %s73, 1
          %s817 = smul.addr %s816, 16
          %s818 = scalar_lea.vmem [#allocation5], %s817
          %819 = dma.done %s815, 256
        $region44: #{tpu_custom_call.1} parent=39 // pred_fallthru
          _
      $region40: #{tpu_custom_call.1} parent=5 // pred_fallthru
        _
    $region6: #{tpu_custom_call.1} parent=1 // loop_footer
      %s16 = sadd.s32 1, %s12
    $region7: #{tpu_custom_call.1} parent=1 // loop_footer_branch
      %11 = sbr.rel target = $region3
    $region8: #{tpu_custom_call.1} parent=1 // loop_exit
      _
    %820 = vsyncpa [#allocation3], 1
    %s821 = scalar_lea.sflag [#allocation3], 1
    %822 = vsyncpa %s821, 1
    %823 = vsyncpa [#allocation4], 1
    %s824 = scalar_lea.sflag [#allocation4], 1
    %825 = vsyncpa %s824, 1

</llo_original>
